<compile_context>
chip_gen: v7x
topology: tpu7x:2x2x1
jax: 0.10.0
libtpu: 0.0.40
codegen_flags: <defaults>
</compile_context>

<pallas_src>
import functools

import jax
import jax.numpy as jnp
import numpy as np
from jax.experimental import pallas as pl
from jax.experimental.pallas import tpu as pltpu


def attention_head_kernel(x_ref, w_ref, b_ref, cos_ref, sin_ref, o_ref,
                          *, head_size, use_bf16_mxu):
    Bt, S, H = x_ref.shape
    D = head_size
    W = 3 * D

    x = x_ref[...].reshape(Bt * S, H)          # merge leading dims (lane dim unchanged)
    w = w_ref[...]
    if use_bf16_mxu:
        x = x.astype(jnp.bfloat16)
        w = w.astype(jnp.bfloat16)

    # Fused q/k/v projection: one (Bt*S, H) @ (H, 3D) MXU pass.
    # (1/sqrt(D) is already folded into the q columns of w/b on the host.)
    qkv = jnp.dot(x, w, preferred_element_type=jnp.float32) + b_ref[...]   # (Bt*S, 3D)

    # Interleaved-pair RoPE on the whole fused slab via XLU rolls:
    #   swap[2j] = t[2j+1]   (roll by W-1  ==  roll by -1)
    #   swap[2j+1] = t[2j]   (roll by 1)
    # sin table already carries the -/+ pair sign; cos=1 / sin=0 on the v segment.
    lane = jax.lax.broadcasted_iota(jnp.int32, (Bt * S, W), 1)
    swap = jnp.where((lane & 1) == 0,
                     pltpu.roll(qkv, W - 1, axis=1),    # result[i] = t[i+1]
                     pltpu.roll(qkv, 1, axis=1))        # result[i] = t[i-1]
    qkv = qkv * cos_ref[...] + swap * sin_ref[...]

    qkv = qkv.reshape(Bt, S, W)
    q = qkv[..., :D]              # pre-scaled by 1/sqrt(D), RoPE'd
    k = qkv[..., D:2 * D]         # RoPE'd (returned as kv-cache entry)
    v = qkv[..., 2 * D:]

    # QK^T (scale already in q) + in-kernel causal additive bias.
    scores = jnp.einsum('bqd,bkd->bqk', q, k,
                        preferred_element_type=jnp.float32)          # (Bt, S, S)
    row = jax.lax.broadcasted_iota(jnp.int32, (S, S), 0)
    col = jax.lax.broadcasted_iota(jnp.int32, (S, S), 1)
    bias = jnp.where(col <= row, 0.0, -1e9).astype(jnp.float32)
    scores = scores + bias[None]

    # Numerically stable softmax; reciprocal on the EUP instead of a VALU divide.
    m = jnp.max(scores, axis=-1, keepdims=True)
    p = jnp.exp(scores - m)
    denom = jnp.sum(p, axis=-1, keepdims=True)
    attn = p * pl.reciprocal(denom, approx=True)

    pv_v = v
    if use_bf16_mxu:
        attn = attn.astype(jnp.bfloat16)
        pv_v = v.astype(jnp.bfloat16)
    out = jnp.einsum('bqk,bkd->bqd', attn, pv_v,
                     preferred_element_type=jnp.float32)             # (Bt, S, D)

    # Single lane-dense store: [attn_out | k | v].
    o_ref[...] = jnp.concatenate([out, k, v], axis=-1).astype(o_ref.dtype)


def attention_head(x, wq, wk, wv, bq, bk, bv, cos, sin, *,
                   block_b=None, use_bf16_mxu=False):
    """AttentionHead forward (naive backend, kv_cache=None, causal bias).

    x: (B, S, H); w*: (H, D) (pre-transposed nn.Linear weights); b*: (1, D);
    cos/sin: (S, D) interleaved RoPE tables (cos/sin repeated per pair).
    Returns (attn_result, k, v), each (B, S, D); k is post-RoPE.
    """
    B, S, H = x.shape
    D = wq.shape[1]
    Bt = B if block_b is None else block_b
    assert B % Bt == 0, "block_b must divide batch"

    scale = 1.0 / (D ** 0.5)
    # Trace-time prep (tiny, one-off): fuse weights/biases, fold the softmax scale
    # into the q columns, build the full-slab RoPE tables (pair sign folded into
    # sin, identity on the v segment), tiled to the flattened (Bt*S, 3D) block.
    w_fused = jnp.concatenate([wq * scale, wk, wv], axis=1)            # (H, 3D)
    b_fused = jnp.concatenate([bq * scale, bk, bv], axis=1)            # (1, 3D)

    pair_sign = jnp.tile(jnp.asarray([-1.0, 1.0], dtype=sin.dtype), D // 2)
    sin_signed = sin * pair_sign[None, :]                              # (S, D)
    cos_full = jnp.concatenate([cos, cos, jnp.ones((S, D), cos.dtype)], axis=1)
    sin_full = jnp.concatenate([sin_signed, sin_signed,
                                jnp.zeros((S, D), sin.dtype)], axis=1)
    cos_tiled = jnp.tile(cos_full, (Bt, 1))                            # (Bt*S, 3D)
    sin_tiled = jnp.tile(sin_full, (Bt, 1))

    kernel = functools.partial(attention_head_kernel, head_size=D,
                               use_bf16_mxu=use_bf16_mxu)

    grid_spec = pltpu.PrefetchScalarGridSpec(
        num_scalar_prefetch=0,
        grid=(B // Bt,),
        in_specs=[
            pl.BlockSpec((Bt, S, H), lambda i: (i, 0, 0)),        # x
            pl.BlockSpec((H, 3 * D), lambda i: (0, 0)),           # fused W (q pre-scaled)
            pl.BlockSpec((1, 3 * D), lambda i: (0, 0)),           # fused b
            pl.BlockSpec((Bt * S, 3 * D), lambda i: (0, 0)),      # cos slab
            pl.BlockSpec((Bt * S, 3 * D), lambda i: (0, 0)),      # signed sin slab
        ],
        out_specs=pl.BlockSpec((Bt, S, 3 * D), lambda i: (i, 0, 0)),
    )
    slab = pl.pallas_call(
        kernel,
        out_shape=jax.ShapeDtypeStruct((B, S, 3 * D), x.dtype),
        grid_spec=grid_spec,
        compiler_params=pltpu.CompilerParams(dimension_semantics=("parallel",)),
    )(x, w_fused, b_fused, cos_tiled, sin_tiled)

    return slab[..., :D], slab[..., D:2 * D], slab[..., 2 * D:]


def reference(x, wq, wk, wv, bq, bk, bv, cos, sin, bias, D):
    """Pure-JAX replica of the PyTorch forward (naive backend, no kv_cache)."""
    q = x @ wq + bq
    k = x @ wk + bk
    v = x @ wv + bv
    ch, sh = cos[:, 0::2], sin[:, 0::2]            # (S, D/2)

    def rope(t):
        tr, ti = t[..., 0::2], t[..., 1::2]
        out_r = tr * ch - ti * sh
        out_i = tr * sh + ti * ch
        return jnp.stack([out_r, out_i], axis=-1).reshape(t.shape)

    q, k = rope(q), rope(k)
    scores = jnp.einsum('bqd,bkd->bqk', q, k) / (D ** 0.5) + bias[None]
    attn = jax.nn.softmax(scores, axis=-1)
    return jnp.einsum('bqk,bkd->bqd', attn, v), k, v


if __name__ == "__main__":
    B, S, H = 2, 8, 32
    num_heads = 4
    D = H // num_heads          # head_size = 8

    key = jax.random.PRNGKey(0)
    kx, kq, kk, kv, kbq, kbk, kbv = jax.random.split(key, 7)

    x = jax.random.normal(kx, (B, S, H), dtype=jnp.float32)

    # nn.Linear(hidden, head_size): weight is (D, H); we store transposed (H, D).
    wq = jax.random.normal(kq, (H, D), dtype=jnp.float32) * 0.1
    wk = jax.random.normal(kk, (H, D), dtype=jnp.float32) * 0.1
    wv = jax.random.normal(kv, (H, D), dtype=jnp.float32) * 0.1
    bq = jax.random.normal(kbq, (1, D), dtype=jnp.float32) * 0.1
    bk = jax.random.normal(kbk, (1, D), dtype=jnp.float32) * 0.1
    bv = jax.random.normal(kbv, (1, D), dtype=jnp.float32) * 0.1

    # Llama-style rope_cache truncated to the first S positions, expanded to
    # interleaved cos/sin tables of shape (S, D).
    inv_freq = 1.0 / (10000.0 ** (np.arange(0, D, 2, dtype=np.float32) / D))
    angles = np.arange(S, dtype=np.float32)[:, None] * inv_freq[None, :]   # (S, D/2)
    cos = jnp.asarray(np.repeat(np.cos(angles), 2, axis=1))                # (S, D)
    sin = jnp.asarray(np.repeat(np.sin(angles), 2, axis=1))                # (S, D)

    # Causal additive mask bias used by the reference (the kernel builds the same
    # causal bias in-kernel from iota).
    i = np.arange(S)[:, None]
    j = np.arange(S)[None, :]
    bias = jnp.asarray(np.where(j <= i, 0.0, -1e9).astype(np.float32))

    out, k_cache, v_cache = attention_head(x, wq, wk, wv, bq, bk, bv, cos, sin)
    jax.block_until_ready((out, k_cache, v_cache))

    ref_out, ref_k, ref_v = reference(x, wq, wk, wv, bq, bk, bv, cos, sin, bias, D)
    # attn output tolerance is looser to allow for the EUP approximate reciprocal
    # in the softmax normalization; k/v are exact projections/rotations.
    np.testing.assert_allclose(np.asarray(out), np.asarray(ref_out), rtol=5e-3, atol=5e-3)
    np.testing.assert_allclose(np.asarray(k_cache), np.asarray(ref_k), rtol=1e-4, atol=1e-4)
    np.testing.assert_allclose(np.asarray(v_cache), np.asarray(ref_v), rtol=1e-4, atol=1e-4)

    print("KERNEL_OK")
</pallas_src>

<mosaic_0001>
module attributes {stable_mosaic.version = 11 : i64} {
  func.func @attention_head_kernel(%arg0: i32, %arg1: memref<2x8x32xf32, #tpu.memory_space<vmem>>, %arg2: memref<32x24xf32, #tpu.memory_space<vmem>>, %arg3: memref<1x24xf32, #tpu.memory_space<vmem>>, %arg4: memref<16x24xf32, #tpu.memory_space<vmem>>, %arg5: memref<16x24xf32, #tpu.memory_space<vmem>>, %arg6: memref<2x8x24xf32, #tpu.memory_space<vmem>>) attributes {dimension_semantics = [#tpu.dimension_semantics<parallel>], iteration_bounds = array<i64: 1>, scalar_prefetch = 0 : i64, scratch_operands = 0 : i64, tpu.core_type = #tpu.core_type<tc>, window_params = [{transform_indices = @transform_0, window_bounds = array<i64: 2, 8, 32>}, {pipeline_mode = #tpu.pipeline_mode<synchronous>, transform_indices = @transform_1, window_bounds = array<i64: 32, 24>}, {pipeline_mode = #tpu.pipeline_mode<synchronous>, transform_indices = @transform_2, window_bounds = array<i64: 1, 24>}, {pipeline_mode = #tpu.pipeline_mode<synchronous>, transform_indices = @transform_3, window_bounds = array<i64: 16, 24>}, {pipeline_mode = #tpu.pipeline_mode<synchronous>, transform_indices = @transform_4, window_bounds = array<i64: 16, 24>}, {transform_indices = @transform_5, window_bounds = array<i64: 2, 8, 24>}]} {
    %c0 = arith.constant 0 : index
    %c0_0 = arith.constant 0 : index
    %c0_1 = arith.constant 0 : index
    %0 = vector.load %arg1[%c0, %c0_0, %c0_1] : memref<2x8x32xf32, #tpu.memory_space<vmem>>, vector<2x8x32xf32>
    %1 = vector.shape_cast %0 : vector<2x8x32xf32> to vector<16x32xf32>
    %c0_2 = arith.constant 0 : index
    %c0_3 = arith.constant 0 : index
    %2 = vector.load %arg2[%c0_2, %c0_3] : memref<32x24xf32, #tpu.memory_space<vmem>>, vector<32x24xf32>
    %cst = arith.constant dense<0.000000e+00> : vector<16x24xf32>
    %3 = tpu.matmul %1, %2, %cst {dimension_numbers = #tpu.dot_dimension_numbers<[1], [0], [0], [1], [0, 0, 1, 1], [], []>} : vector<16x32xf32>, vector<32x24xf32>, vector<16x24xf32> -> vector<16x24xf32>
    %c0_4 = arith.constant 0 : index
    %c0_5 = arith.constant 0 : index
    %4 = vector.load %arg3[%c0_4, %c0_5] : memref<1x24xf32, #tpu.memory_space<vmem>>, vector<1x24xf32>
    %5 = vector.broadcast %4 : vector<1x24xf32> to vector<16x24xf32>
    %6 = arith.addf %3, %5 : vector<16x24xf32>
    %7 = tpu.iota {dimensions = array<i32: 1>} : vector<16x24xi32>
    %c1_i32 = arith.constant 1 : i32
    %8 = vector.broadcast %c1_i32 : i32 to vector<16x24xi32>
    %9 = arith.andi %7, %8 : vector<16x24xi32>
    %c0_i32 = arith.constant 0 : i32
    %10 = vector.broadcast %c0_i32 : i32 to vector<16x24xi32>
    %11 = arith.cmpi eq, %9, %10 : vector<16x24xi32>
    %c23_i32 = arith.constant 23 : i32
    %12 = tpu.dynamic_rotate %6 by %c23_i32 dim 1 : vector<16x24xf32>, i32 -> vector<16x24xf32>
    %c1_i32_6 = arith.constant 1 : i32
    %13 = tpu.dynamic_rotate %6 by %c1_i32_6 dim 1 : vector<16x24xf32>, i32 -> vector<16x24xf32>
    %14 = arith.select %11, %12, %13 : vector<16x24xi1>, vector<16x24xf32>
    %c0_7 = arith.constant 0 : index
    %c0_8 = arith.constant 0 : index
    %15 = vector.load %arg4[%c0_7, %c0_8] : memref<16x24xf32, #tpu.memory_space<vmem>>, vector<16x24xf32>
    %16 = arith.mulf %6, %15 : vector<16x24xf32>
    %c0_9 = arith.constant 0 : index
    %c0_10 = arith.constant 0 : index
    %17 = vector.load %arg5[%c0_9, %c0_10] : memref<16x24xf32, #tpu.memory_space<vmem>>, vector<16x24xf32>
    %18 = arith.mulf %14, %17 : vector<16x24xf32>
    %19 = arith.addf %16, %18 : vector<16x24xf32>
    %20 = vector.shape_cast %19 : vector<16x24xf32> to vector<2x8x24xf32>
    %21 = vector.extract_strided_slice %20 {offsets = [0, 0, 0], sizes = [2, 8, 8], strides = [1, 1, 1]} : vector<2x8x24xf32> to vector<2x8x8xf32>
    %22 = vector.extract_strided_slice %20 {offsets = [0, 0, 8], sizes = [2, 8, 8], strides = [1, 1, 1]} : vector<2x8x24xf32> to vector<2x8x8xf32>
    %23 = vector.extract_strided_slice %20 {offsets = [0, 0, 16], sizes = [2, 8, 8], strides = [1, 1, 1]} : vector<2x8x24xf32> to vector<2x8x8xf32>
    "tpu.trace_start"() <{level = 10 : i32, message = "bqd,bkd->bqk"}> : () -> ()
    %cst_11 = arith.constant dense<0.000000e+00> : vector<2x8x8xf32>
    %24 = tpu.matmul %21, %22, %cst_11 {dimension_numbers = #tpu.dot_dimension_numbers<[2], [2], [1], [1], [0, 0, 0, 1, 1, 1], [0], [0]>} : vector<2x8x8xf32>, vector<2x8x8xf32>, vector<2x8x8xf32> -> vector<2x8x8xf32>
    "tpu.trace_stop"() : () -> ()
    %25 = tpu.iota {dimensions = array<i32: 0>} : vector<8x8xi32>
    %26 = tpu.iota {dimensions = array<i32: 1>} : vector<8x8xi32>
    %27 = arith.cmpi sle, %26, %25 : vector<8x8xi32>
    %cst_12 = arith.constant 0.000000e+00 : f32
    %cst_13 = arith.constant -1.000000e+09 : f32
    %28 = vector.broadcast %cst_12 : f32 to vector<8x8xf32>
    %29 = vector.broadcast %cst_13 : f32 to vector<8x8xf32>
    %30 = arith.select %27, %28, %29 : vector<8x8xi1>, vector<8x8xf32>
    %31 = vector.shape_cast %30 : vector<8x8xf32> to vector<1x8x8xf32>
    %32 = vector.broadcast %31 : vector<1x8x8xf32> to vector<2x8x8xf32>
    %33 = arith.addf %24, %32 : vector<2x8x8xf32>
    %cst_14 = arith.constant dense<0xFF800000> : vector<2x8xf32>
    %34 = vector.multi_reduction <maximumf>, %33, %cst_14 [2] : vector<2x8x8xf32> to vector<2x8xf32>
    %35 = vector.shape_cast %34 : vector<2x8xf32> to vector<2x8x1xf32>
    %36 = vector.broadcast %35 : vector<2x8x1xf32> to vector<2x8x8xf32>
    %37 = arith.subf %33, %36 : vector<2x8x8xf32>
    %38 = math.exp %37 : vector<2x8x8xf32>
    %cst_15 = arith.constant dense<0.000000e+00> : vector<2x8xf32>
    %39 = vector.multi_reduction <add>, %38, %cst_15 [2] : vector<2x8x8xf32> to vector<2x8xf32>
    %40 = vector.shape_cast %39 : vector<2x8xf32> to vector<2x8x1xf32>
    %41 = tpu.reciprocal %40 {approx = true} : vector<2x8x1xf32> -> vector<2x8x1xf32>
    %42 = vector.broadcast %41 : vector<2x8x1xf32> to vector<2x8x8xf32>
    %43 = arith.mulf %38, %42 : vector<2x8x8xf32>
    "tpu.trace_start"() <{level = 10 : i32, message = "bqk,bkd->bqd"}> : () -> ()
    %cst_16 = arith.constant dense<0.000000e+00> : vector<2x8x8xf32>
    %44 = tpu.matmul %43, %23, %cst_16 {dimension_numbers = #tpu.dot_dimension_numbers<[2], [1], [1], [2], [0, 0, 0, 1, 1, 2], [0], [0]>} : vector<2x8x8xf32>, vector<2x8x8xf32>, vector<2x8x8xf32> -> vector<2x8x8xf32>
    "tpu.trace_stop"() : () -> ()
    %45 = tpu.concatenate %44, %22, %23 in 2 : vector<2x8x8xf32>, vector<2x8x8xf32>, vector<2x8x8xf32> -> vector<2x8x24xf32>
    %c0_17 = arith.constant 0 : index
    %c0_18 = arith.constant 0 : index
    %c0_19 = arith.constant 0 : index
    %46 = vector.load %arg6[%c0_17, %c0_18, %c0_19] : memref<2x8x24xf32, #tpu.memory_space<vmem>>, vector<2x8x24xf32>
    tpu.vector_store %arg6[%c0_17, %c0_18, %c0_19], %45 {strides = array<i32>} : memref<2x8x24xf32, #tpu.memory_space<vmem>>, vector<2x8x24xf32>,
    return
  }
  func.func @transform_0(%arg0: i32) -> (i32, i32, i32) {
    %c0_i32 = arith.constant 0 : i32
    %c0_i32_0 = arith.constant 0 : i32
    %c0_i32_1 = arith.constant 0 : i32
    return %arg0, %c0_i32, %c0_i32_0 : i32, i32, i32
  }
  func.func @transform_1(%arg0: i32) -> (i32, i32) {
    %c0_i32 = arith.constant 0 : i32
    %c0_i32_0 = arith.constant 0 : i32
    %c0_i32_1 = arith.constant 0 : i32
    return %c0_i32, %c0_i32_0 : i32, i32
  }
  func.func @transform_2(%arg0: i32) -> (i32, i32) {
    %c0_i32 = arith.constant 0 : i32
    %c0_i32_0 = arith.constant 0 : i32
    %c0_i32_1 = arith.constant 0 : i32
    return %c0_i32, %c0_i32_0 : i32, i32
  }
  func.func @transform_3(%arg0: i32) -> (i32, i32) {
    %c0_i32 = arith.constant 0 : i32
    %c0_i32_0 = arith.constant 0 : i32
    %c0_i32_1 = arith.constant 0 : i32
    return %c0_i32, %c0_i32_0 : i32, i32
  }
  func.func @transform_4(%arg0: i32) -> (i32, i32) {
    %c0_i32 = arith.constant 0 : i32
    %c0_i32_0 = arith.constant 0 : i32
    %c0_i32_1 = arith.constant 0 : i32
    return %c0_i32, %c0_i32_0 : i32, i32
  }
  func.func @transform_5(%arg0: i32) -> (i32, i32, i32) {
    %c0_i32 = arith.constant 0 : i32
    %c0_i32_0 = arith.constant 0 : i32
    %c0_i32_1 = arith.constant 0 : i32
    return %arg0, %c0_i32, %c0_i32_0 : i32, i32, i32
  }
}

</mosaic_0001>

<llo_original>
// kernel: tpu_custom_call.1
$region0: #{tpu_custom_call.1}
  #allocation0 [shape = 'u32[]', space=smem, size = 0x4, offset = 0x4, fixed_abs, tag = 'smem constant byte address 0x4 - core index']
  #allocation1 [shape = 'u32[144,128]{1,0:T(1,128)}', space=vmem, size = 0x12000, scoped, tag = 'internal scratch']
  %s0 = inlined_call_operand.vmem [shape: f32[2,8,32], index: 0, kind: input, shape index: {}]
  %s1 = inlined_call_operand.vmem [shape: f32[32,24], index: 1, kind: input, shape index: {}]
  %s2 = inlined_call_operand.vmem [shape: f32[1,24], index: 2, kind: input, shape index: {}]
  %s3 = inlined_call_operand.vmem [shape: f32[16,24], index: 3, kind: input, shape index: {}]
  %s4 = inlined_call_operand.vmem [shape: f32[16,24], index: 4, kind: input, shape index: {}]
  %s5 = inlined_call_operand.hbm [shape: f32[2,8,24], index: 5, kind: output, shape index: {}]
  %s6 = sld [smem:[#allocation0]]
  $region30: #{tpu_custom_call.1} parent=0
    _
  %s8 = ssub.s32 1, %s6
  %s9 = scalar_select 0, %s8, %s6
  $region1: #{tpu_custom_call.1} parent=0
    #allocation2 [shape = 'u8[8192]{0}', space=vmem, size = 0x2000, scoped, tag = 'output window, operand 0, single buffered']
    #allocation3 [shape = 's32[1]{0}', space=sflag, size = 0x4, scoped, tag = 'scoped memory for tpu_custom_call.1']
    %10 = vsyncpa [#allocation3], 0
    // Predicated region
    $region2: #{tpu_custom_call.1} parent=1 // pred_check
      _
    $region3: #{tpu_custom_call.1} parent=1 // pred_check_branch
      %12 = sbr.rel (0) target = $region5
    $region4: #{tpu_custom_call.1} parent=1 // pred_region
      _
    $region5: #{tpu_custom_call.1} parent=1 // pred_fallthru
      _
    // Predicated region
    $region6: #{tpu_custom_call.1} parent=1 // pred_check
      _
    $region7: #{tpu_custom_call.1} parent=1 // pred_check_branch
      %14 = sbr.rel (0) target = $region9
    $region8: #{tpu_custom_call.1} parent=1 // pred_region
      _
    $region9: #{tpu_custom_call.1} parent=1 // pred_fallthru
      _
    // Predicated region
    $region10: #{tpu_custom_call.1} parent=1 // pred_check
      _
    $region11: #{tpu_custom_call.1} parent=1 // pred_check_branch
      %16 = sbr.rel (0) target = $region13
    $region12: #{tpu_custom_call.1} parent=1 // pred_region
      _
    $region13: #{tpu_custom_call.1} parent=1 // pred_fallthru
      _
    // Predicated region
    $region14: #{tpu_custom_call.1} parent=1 // pred_check
      _
    $region15: #{tpu_custom_call.1} parent=1 // pred_check_branch
      %18 = sbr.rel (0) target = $region17
    $region16: #{tpu_custom_call.1} parent=1 // pred_region
      _
    $region17: #{tpu_custom_call.1} parent=1 // pred_fallthru
      _
    // Predicated region
    $region18: #{tpu_custom_call.1} parent=1 // pred_check
      _
    $region19: #{tpu_custom_call.1} parent=1 // pred_check_branch
      %20 = sbr.rel (0) target = $region21
    $region20: #{tpu_custom_call.1} parent=1 // pred_region
      _
    $region21: #{tpu_custom_call.1} parent=1 // pred_fallthru
      _
    %v21 = vld [vmem:[%s0] sm:$0xff]
    %v22 = vld [vmem:[%s0 + $0x8] sm:$0xff]
    %v23 = vld [vmem:[%s1] sm:$0xff]
    %v24 = vld [vmem:[%s1 + $0x8] sm:$0xff]
    %v25 = vld [vmem:[%s1 + $0x10] sm:$0xff]
    %v26 = vld [vmem:[%s1 + $0x18] sm:$0xff]
    %v27 = vld [vmem:[%s2] sm:$0x1]
    %v29 = vlaneseq
    %v30 = vshrl.u32 %v29, 7
    %v31 = vsub.s32 0, %v30
    %v32 = vrot.slane %v27, %v31
    %vm34 = vcmask 261120
    %v36 = vsel %vm34, %v21, 0
    %v39 = vsel %vm34, %v22, 0
    %41 = vmatprep.subr.mxu0 0.0
    %42 = vmatpush1.msra.mxu0 %v23
    %43 = vmatprep.subr.mxu0 0.0
    %44 = vmatpush1.msra.mxu0 %v24
    %45 = vmatprep.subr.mxu0 0.0
    %46 = vmatpush1.msra.mxu0 %v25
    %47 = vmatprep.subr.mxu0 0.0
    %48 = vmatpush1.msra.mxu0 %v26
    %49 = vmatprep.subr.mxu0 0.0
    %50 = vmatpush1.msra.mxu0 0.0
    %51 = vmatprep.subr.mxu0 0.0
    %52 = vmatpush1.msra.mxu0 0.0
    %53 = vmatprep.subr.mxu0 0.0
    %54 = vmatpush1.msra.mxu0 0.0
    %55 = vmatprep.subr.mxu0 0.0
    %56 = vmatpush1.msra.mxu0 0.0
    %57 = vmatprep.subr.mxu0 0.0
    %58 = vmatpush1.msra.mxu0 0.0
    %59 = vmatprep.subr.mxu0 0.0
    %60 = vmatpush1.msra.mxu0 0.0
    %61 = vmatprep.subr.mxu0 0.0
    %62 = vmatpush1.msra.mxu0 0.0
    %63 = vmatprep.subr.mxu0 0.0
    %64 = vmatpush1.msra.mxu0 0.0
    %65 = vmatprep.subr.mxu0 0.0
    %66 = vmatpush1.msra.mxu0 0.0
    %67 = vmatprep.subr.mxu0 0.0
    %68 = vmatpush1.msra.mxu0 0.0
    %69 = vmatprep.subr.mxu0 0.0
    %70 = vmatpush1.msra.mxu0 0.0
    %71 = vmatprep.subr.mxu0 0.0
    %72 = vmatpush1.msra.mxu0 0.0
    %73 = vmatprep.subr.mxu0 0.0
    %74 = vmatpush1.msra.mxu0 0.0
    %75 = vmatprep.subr.mxu0 0.0
    %76 = vmatpush1.msra.mxu0 0.0
    %77 = vmatprep.subr.mxu0 0.0
    %78 = vmatpush1.msra.mxu0 0.0
    %79 = vmatprep.subr.mxu0 0.0
    %80 = vmatpush1.msra.mxu0 0.0
    %81 = vmatprep.subr.mxu0 0.0
    %82 = vmatpush1.msra.mxu0 0.0
    %83 = vmatprep.subr.mxu0 0.0
    %84 = vmatpush1.msra.mxu0 0.0
    %85 = vmatprep.subr.mxu0 0.0
    %86 = vmatpush1.msra.mxu0 0.0
    %87 = vmatprep.subr.mxu0 0.0
    %88 = vmatpush1.msra.mxu0 0.0
    %89 = vmatprep.subr.mxu0 0.0
    %90 = vmatpush1.msra.mxu0 0.0
    %91 = vmatprep.subr.mxu0 0.0
    %92 = vmatpush1.msra.mxu0 0.0
    %93 = vmatprep.subr.mxu0 0.0
    %94 = vmatpush1.msra.mxu0 0.0
    %95 = vmatprep.subr.mxu0 0.0
    %96 = vmatpush1.msra.mxu0 0.0
    %97 = vmatprep.subr.mxu0 0.0
    %98 = vmatpush1.msra.mxu0 0.0
    %99 = vmatprep.subr.mxu0 0.0
    %100 = vmatpush1.msra.mxu0 0.0
    %101 = vmatprep.subr.mxu0 0.0
    %102 = vmatpush1.msra.mxu0 0.0
    %103 = vmatprep.subr.mxu0 0.0
    %104 = vmatpush1.msra.mxu0 0.0
    %105 = vmatprep.mubr.f32.mxu0 0.0
    %106 = vmatmul.mubr.f32.gmra.mrb[0].mxu0 %v36
    %v107 = vpop.f32.mrb[0].mxu0
    %v108 = vadd.f32 %v32, %v107
    %v109 = vpop.f32.mrb[0].mxu0
    %110 = vmatprep.mubr.f32.mxu0 0.0
    %111 = vmatmul.mubr.f32.gmra.mrb[0].mxu0 %v39
    %v112 = vpop.f32.mrb[0].mxu0
    %v113 = vadd.f32 %v32, %v112
    %v114 = vpop.f32.mrb[0].mxu0
    %115 = vdwg.mxu0
    %v116 = vlaneseq
    %v117 = vand.u32 %v116, 127
    %v118 = vand.u32 %v117, 1
    %vm119 = vcmp.eq.s32.totalorder %v118, 0
    %vm120 = vcmask 1047744
    %121 = vrot.lane.b32.xlu0 %v108, 24
    %v122 = vpop.permute.xlu0 %121
    %v123 = vsel %vm120, %v122, %v108
    %124 = vrot.lane.b32.xlu0 %v113, 24
    %v125 = vpop.permute.xlu0 %124
    %v126 = vsel %vm120, %v125, %v113
    %127 = vrot.lane.b32.xlu0 %v123, 24
    %v128 = vpop.permute.xlu0 %127
    %129 = vrot.lane.b32.xlu0 %v126, 24
    %v130 = vpop.permute.xlu0 %129
    %v131 = vsel %vm120, %v128, %v108
    %v132 = vsel %vm120, %v130, %v113
    %135 = vrot.lane.b32.xlu0 %v131, 127
    %v136 = vpop.permute.xlu0 %135
    %137 = vrot.lane.b32.xlu0 %v132, 127
    %v138 = vpop.permute.xlu0 %137
    %141 = vrot.lane.b32.xlu0 %v131, 105
    %v142 = vpop.permute.xlu0 %141
    %143 = vrot.lane.b32.xlu0 %v132, 105
    %v144 = vpop.permute.xlu0 %143
    %v147 = vsel %vm119, %v136, %v142
    %v148 = vsel %vm119, %v138, %v144
    %v149 = vld [vmem:[%s3] sm:$0xff]
    %v150 = vld [vmem:[%s3 + $0x8] sm:$0xff]
    %v151 = vmul.f32 %v108, %v149
    %v152 = vmul.f32 %v113, %v150
    %v153 = vld [vmem:[%s4] sm:$0xff]
    %v154 = vld [vmem:[%s4 + $0x8] sm:$0xff]
    %v155 = vmul.f32 %v147, %v153
    %v156 = vmul.f32 %v148, %v154
    %v157 = vadd.f32 %v151, %v155
    %v158 = vadd.f32 %v152, %v156
    %v159 = vlaneseq
    %v160 = vshrl.u32 %v159, 7
    %vm161 = vcmp.le.s32.totalorder %v117, %v160
    %v162 = vsel %vm161, 0.0, -1e+09
    %164 = vrot.lane.b32.xlu0 %v157, 120
    %v165 = vpop.permute.xlu0 %164
    %vm166 = vcmask 64512
    %v167 = vsel %vm166, %v157, 0
    %v169 = vsel %vm166, %v165, 0
    %171 = vmatprep.subr.mxu0 0.0
    %172 = vmatpush1.xpose.msra.mxu0 %v169
    %173 = vmatprep.subr.mxu0 0.0
    %174 = vmatpush1.xpose.msra.mxu0 0.0
    %175 = vmatprep.subr.mxu0 0.0
    %176 = vmatpush1.xpose.msra.mxu0 0.0
    %177 = vmatprep.subr.mxu0 0.0
    %178 = vmatpush1.xpose.msra.mxu0 0.0
    %179 = vmatprep.subr.mxu0 0.0
    %180 = vmatpush1.xpose.msra.mxu0 0.0
    %181 = vmatprep.subr.mxu0 0.0
    %182 = vmatpush1.xpose.msra.mxu0 0.0
    %183 = vmatprep.subr.mxu0 0.0
    %184 = vmatpush1.xpose.msra.mxu0 0.0
    %185 = vmatprep.subr.mxu0 0.0
    %186 = vmatpush1.xpose.msra.mxu0 0.0
    %187 = vmatprep.subr.mxu0 0.0
    %188 = vmatpush1.xpose.msra.mxu0 0.0
    %189 = vmatprep.subr.mxu0 0.0
    %190 = vmatpush1.xpose.msra.mxu0 0.0
    %191 = vmatprep.subr.mxu0 0.0
    %192 = vmatpush1.xpose.msra.mxu0 0.0
    %193 = vmatprep.subr.mxu0 0.0
    %194 = vmatpush1.xpose.msra.mxu0 0.0
    %195 = vmatprep.subr.mxu0 0.0
    %196 = vmatpush1.xpose.msra.mxu0 0.0
    %197 = vmatprep.subr.mxu0 0.0
    %198 = vmatpush1.xpose.msra.mxu0 0.0
    %199 = vmatprep.subr.mxu0 0.0
    %200 = vmatpush1.xpose.msra.mxu0 0.0
    %201 = vmatprep.subr.mxu0 0.0
    %202 = vmatpush1.xpose.msra.mxu0 0.0
    %203 = vmatprep.subr.mxu0 0.0
    %204 = vmatpush1.xpose.msra.mxu0 0.0
    %205 = vmatprep.subr.mxu0 0.0
    %206 = vmatpush1.xpose.msra.mxu0 0.0
    %207 = vmatprep.subr.mxu0 0.0
    %208 = vmatpush1.xpose.msra.mxu0 0.0
    %209 = vmatprep.subr.mxu0 0.0
    %210 = vmatpush1.xpose.msra.mxu0 0.0
    %211 = vmatprep.subr.mxu0 0.0
    %212 = vmatpush1.xpose.msra.mxu0 0.0
    %213 = vmatprep.subr.mxu0 0.0
    %214 = vmatpush1.xpose.msra.mxu0 0.0
    %215 = vmatprep.subr.mxu0 0.0
    %216 = vmatpush1.xpose.msra.mxu0 0.0
    %217 = vmatprep.subr.mxu0 0.0
    %218 = vmatpush1.xpose.msra.mxu0 0.0
    %219 = vmatprep.subr.mxu0 0.0
    %220 = vmatpush1.xpose.msra.mxu0 0.0
    %221 = vmatprep.subr.mxu0 0.0
    %222 = vmatpush1.xpose.msra.mxu0 0.0
    %223 = vmatprep.subr.mxu0 0.0
    %224 = vmatpush1.xpose.msra.mxu0 0.0
    %225 = vmatprep.subr.mxu0 0.0
    %226 = vmatpush1.xpose.msra.mxu0 0.0
    %227 = vmatprep.subr.mxu0 0.0
    %228 = vmatpush1.xpose.msra.mxu0 0.0
    %229 = vmatprep.subr.mxu0 0.0
    %230 = vmatpush1.xpose.msra.mxu0 0.0
    %231 = vmatprep.subr.mxu0 0.0
    %232 = vmatpush1.xpose.msra.mxu0 0.0
    %233 = vmatprep.subr.mxu0 0.0
    %234 = vmatpush1.xpose.msra.mxu0 0.0
    %235 = vmatprep.mubr.f32.mxu0 0.0
    %236 = vmatmul.mubr.f32.gmra.mrb[0].mxu0 %v167
    %v237 = vpop.f32.mrb[0].mxu0
    %v238 = vadd.f32 %v162, %v237
    %v239 = vpop.f32.mrb[0].mxu0
    %240 = vdwg.mxu0
    %242 = vrot.lane.b32.xlu0 %v158, 120
    %v243 = vpop.permute.xlu0 %242
    %v244 = vsel %vm166, %v158, 0
    %v246 = vsel %vm166, %v243, 0
    %248 = vmatprep.subr.mxu0 0.0
    %249 = vmatpush1.xpose.msra.mxu0 %v246
    %250 = vmatprep.subr.mxu0 0.0
    %251 = vmatpush1.xpose.msra.mxu0 0.0
    %252 = vmatprep.subr.mxu0 0.0
    %253 = vmatpush1.xpose.msra.mxu0 0.0
    %254 = vmatprep.subr.mxu0 0.0
    %255 = vmatpush1.xpose.msra.mxu0 0.0
    %256 = vmatprep.subr.mxu0 0.0
    %257 = vmatpush1.xpose.msra.mxu0 0.0
    %258 = vmatprep.subr.mxu0 0.0
    %259 = vmatpush1.xpose.msra.mxu0 0.0
    %260 = vmatprep.subr.mxu0 0.0
    %261 = vmatpush1.xpose.msra.mxu0 0.0
    %262 = vmatprep.subr.mxu0 0.0
    %263 = vmatpush1.xpose.msra.mxu0 0.0
    %264 = vmatprep.subr.mxu0 0.0
    %265 = vmatpush1.xpose.msra.mxu0 0.0
    %266 = vmatprep.subr.mxu0 0.0
    %267 = vmatpush1.xpose.msra.mxu0 0.0
    %268 = vmatprep.subr.mxu0 0.0
    %269 = vmatpush1.xpose.msra.mxu0 0.0
    %270 = vmatprep.subr.mxu0 0.0
    %271 = vmatpush1.xpose.msra.mxu0 0.0
    %272 = vmatprep.subr.mxu0 0.0
    %273 = vmatpush1.xpose.msra.mxu0 0.0
    %274 = vmatprep.subr.mxu0 0.0
    %275 = vmatpush1.xpose.msra.mxu0 0.0
    %276 = vmatprep.subr.mxu0 0.0
    %277 = vmatpush1.xpose.msra.mxu0 0.0
    %278 = vmatprep.subr.mxu0 0.0
    %279 = vmatpush1.xpose.msra.mxu0 0.0
    %280 = vmatprep.subr.mxu0 0.0
    %281 = vmatpush1.xpose.msra.mxu0 0.0
    %282 = vmatprep.subr.mxu0 0.0
    %283 = vmatpush1.xpose.msra.mxu0 0.0
    %284 = vmatprep.subr.mxu0 0.0
    %285 = vmatpush1.xpose.msra.mxu0 0.0
    %286 = vmatprep.subr.mxu0 0.0
    %287 = vmatpush1.xpose.msra.mxu0 0.0
    %288 = vmatprep.subr.mxu0 0.0
    %289 = vmatpush1.xpose.msra.mxu0 0.0
    %290 = vmatprep.subr.mxu0 0.0
    %291 = vmatpush1.xpose.msra.mxu0 0.0
    %292 = vmatprep.subr.mxu0 0.0
    %293 = vmatpush1.xpose.msra.mxu0 0.0
    %294 = vmatprep.subr.mxu0 0.0
    %295 = vmatpush1.xpose.msra.mxu0 0.0
    %296 = vmatprep.subr.mxu0 0.0
    %297 = vmatpush1.xpose.msra.mxu0 0.0
    %298 = vmatprep.subr.mxu0 0.0
    %299 = vmatpush1.xpose.msra.mxu0 0.0
    %300 = vmatprep.subr.mxu0 0.0
    %301 = vmatpush1.xpose.msra.mxu0 0.0
    %302 = vmatprep.subr.mxu0 0.0
    %303 = vmatpush1.xpose.msra.mxu0 0.0
    %304 = vmatprep.subr.mxu0 0.0
    %305 = vmatpush1.xpose.msra.mxu0 0.0
    %306 = vmatprep.subr.mxu0 0.0
    %307 = vmatpush1.xpose.msra.mxu0 0.0
    %308 = vmatprep.subr.mxu0 0.0
    %309 = vmatpush1.xpose.msra.mxu0 0.0
    %310 = vmatprep.subr.mxu0 0.0
    %311 = vmatpush1.xpose.msra.mxu0 0.0
    %312 = vmatprep.mubr.f32.mxu0 0.0
    %313 = vmatmul.mubr.f32.gmra.mrb[0].mxu0 %v244
    %v314 = vpop.f32.mrb[0].mxu0
    %v315 = vadd.f32 %v162, %v314
    %v316 = vpop.f32.mrb[0].mxu0
    %317 = vdwg.mxu0
    %v318 = vsel %vm166, %v238, -inf
    %319 = vmax.xlane.f32.xlu0 %v318
    %v320 = vpop.xlane.xlu0 %319
    %v321 = vsel %vm166, %v315, -inf
    %322 = vmax.xlane.f32.xlu0 %v321
    %v323 = vpop.xlane.xlu0 %322
    %v324 = vsub.f32 %v238, %v320
    %v325 = vsub.f32 %v315, %v323
    %v326 = vmul.f32 %v324, 1.442695
    %v327 = vpow.pop %v326
    %v328 = vmul.f32 %v325, 1.442695
    %v329 = vpow.pop %v328
    %v330 = vsel %vm166, %v327, 0.0
    %331 = vadd.xlane.f32.xlu0 %v330
    %v332 = vpop.xlane.xlu0 %331
    %v333 = vsel %vm166, %v329, 0.0
    %334 = vadd.xlane.f32.xlu0 %v333
    %v335 = vpop.xlane.xlu0 %334
    %v336 = vrcp.pop %v332
    %v337 = vrcp.pop %v335
    %v338 = vmul.f32 %v327, %v336
    %v339 = vmul.f32 %v329, %v337
    %340 = vrot.lane.b32.xlu0 %v157, 112
    %v341 = vpop.permute.xlu0 %340
    %v344 = vsel %vm166, %v338, 0
    %346 = vmatprep.subr.mxu0 0.0
    %347 = vmatpush1.msra.mxu0 %v341
    %348 = vmatprep.subr.mxu0 0.0
    %349 = vmatpush1.msra.mxu0 0.0
    %350 = vmatprep.subr.mxu0 0.0
    %351 = vmatpush1.msra.mxu0 0.0
    %352 = vmatprep.subr.mxu0 0.0
    %353 = vmatpush1.msra.mxu0 0.0
    %354 = vmatprep.subr.mxu0 0.0
    %355 = vmatpush1.msra.mxu0 0.0
    %356 = vmatprep.subr.mxu0 0.0
    %357 = vmatpush1.msra.mxu0 0.0
    %358 = vmatprep.subr.mxu0 0.0
    %359 = vmatpush1.msra.mxu0 0.0
    %360 = vmatprep.subr.mxu0 0.0
    %361 = vmatpush1.msra.mxu0 0.0
    %362 = vmatprep.subr.mxu0 0.0
    %363 = vmatpush1.msra.mxu0 0.0
    %364 = vmatprep.subr.mxu0 0.0
    %365 = vmatpush1.msra.mxu0 0.0
    %366 = vmatprep.subr.mxu0 0.0
    %367 = vmatpush1.msra.mxu0 0.0
    %368 = vmatprep.subr.mxu0 0.0
    %369 = vmatpush1.msra.mxu0 0.0
    %370 = vmatprep.subr.mxu0 0.0
    %371 = vmatpush1.msra.mxu0 0.0
    %372 = vmatprep.subr.mxu0 0.0
    %373 = vmatpush1.msra.mxu0 0.0
    %374 = vmatprep.subr.mxu0 0.0
    %375 = vmatpush1.msra.mxu0 0.0
    %376 = vmatprep.subr.mxu0 0.0
    %377 = vmatpush1.msra.mxu0 0.0
    %378 = vmatprep.subr.mxu0 0.0
    %379 = vmatpush1.msra.mxu0 0.0
    %380 = vmatprep.subr.mxu0 0.0
    %381 = vmatpush1.msra.mxu0 0.0
    %382 = vmatprep.subr.mxu0 0.0
    %383 = vmatpush1.msra.mxu0 0.0
    %384 = vmatprep.subr.mxu0 0.0
    %385 = vmatpush1.msra.mxu0 0.0
    %386 = vmatprep.subr.mxu0 0.0
    %387 = vmatpush1.msra.mxu0 0.0
    %388 = vmatprep.subr.mxu0 0.0
    %389 = vmatpush1.msra.mxu0 0.0
    %390 = vmatprep.subr.mxu0 0.0
    %391 = vmatpush1.msra.mxu0 0.0
    %392 = vmatprep.subr.mxu0 0.0
    %393 = vmatpush1.msra.mxu0 0.0
    %394 = vmatprep.subr.mxu0 0.0
    %395 = vmatpush1.msra.mxu0 0.0
    %396 = vmatprep.subr.mxu0 0.0
    %397 = vmatpush1.msra.mxu0 0.0
    %398 = vmatprep.subr.mxu0 0.0
    %399 = vmatpush1.msra.mxu0 0.0
    %400 = vmatprep.subr.mxu0 0.0
    %401 = vmatpush1.msra.mxu0 0.0
    %402 = vmatprep.subr.mxu0 0.0
    %403 = vmatpush1.msra.mxu0 0.0
    %404 = vmatprep.subr.mxu0 0.0
    %405 = vmatpush1.msra.mxu0 0.0
    %406 = vmatprep.subr.mxu0 0.0
    %407 = vmatpush1.msra.mxu0 0.0
    %408 = vmatprep.subr.mxu0 0.0
    %409 = vmatpush1.msra.mxu0 0.0
    %410 = vmatprep.mubr.f32.mxu0 0.0
    %411 = vmatmul.mubr.f32.gmra.mrb[0].mxu0 %v344
    %v412 = vpop.f32.mrb[0].mxu0
    %v413 = vadd.f32 0.0, %v412
    %v414 = vpop.f32.mrb[0].mxu0
    %415 = vdwg.mxu0
    %416 = vrot.lane.b32.xlu0 %v158, 112
    %v417 = vpop.permute.xlu0 %416
    %v420 = vsel %vm166, %v339, 0
    %422 = vmatprep.subr.mxu0 0.0
    %423 = vmatpush1.msra.mxu0 %v417
    %424 = vmatprep.subr.mxu0 0.0
    %425 = vmatpush1.msra.mxu0 0.0
    %426 = vmatprep.subr.mxu0 0.0
    %427 = vmatpush1.msra.mxu0 0.0
    %428 = vmatprep.subr.mxu0 0.0
    %429 = vmatpush1.msra.mxu0 0.0
    %430 = vmatprep.subr.mxu0 0.0
    %431 = vmatpush1.msra.mxu0 0.0
    %432 = vmatprep.subr.mxu0 0.0
    %433 = vmatpush1.msra.mxu0 0.0
    %434 = vmatprep.subr.mxu0 0.0
    %435 = vmatpush1.msra.mxu0 0.0
    %436 = vmatprep.subr.mxu0 0.0
    %437 = vmatpush1.msra.mxu0 0.0
    %438 = vmatprep.subr.mxu0 0.0
    %439 = vmatpush1.msra.mxu0 0.0
    %440 = vmatprep.subr.mxu0 0.0
    %441 = vmatpush1.msra.mxu0 0.0
    %442 = vmatprep.subr.mxu0 0.0
    %443 = vmatpush1.msra.mxu0 0.0
    %444 = vmatprep.subr.mxu0 0.0
    %445 = vmatpush1.msra.mxu0 0.0
    %446 = vmatprep.subr.mxu0 0.0
    %447 = vmatpush1.msra.mxu0 0.0
    %448 = vmatprep.subr.mxu0 0.0
    %449 = vmatpush1.msra.mxu0 0.0
    %450 = vmatprep.subr.mxu0 0.0
    %451 = vmatpush1.msra.mxu0 0.0
    %452 = vmatprep.subr.mxu0 0.0
    %453 = vmatpush1.msra.mxu0 0.0
    %454 = vmatprep.subr.mxu0 0.0
    %455 = vmatpush1.msra.mxu0 0.0
    %456 = vmatprep.subr.mxu0 0.0
    %457 = vmatpush1.msra.mxu0 0.0
    %458 = vmatprep.subr.mxu0 0.0
    %459 = vmatpush1.msra.mxu0 0.0
    %460 = vmatprep.subr.mxu0 0.0
    %461 = vmatpush1.msra.mxu0 0.0
    %462 = vmatprep.subr.mxu0 0.0
    %463 = vmatpush1.msra.mxu0 0.0
    %464 = vmatprep.subr.mxu0 0.0
    %465 = vmatpush1.msra.mxu0 0.0
    %466 = vmatprep.subr.mxu0 0.0
    %467 = vmatpush1.msra.mxu0 0.0
    %468 = vmatprep.subr.mxu0 0.0
    %469 = vmatpush1.msra.mxu0 0.0
    %470 = vmatprep.subr.mxu0 0.0
    %471 = vmatpush1.msra.mxu0 0.0
    %472 = vmatprep.subr.mxu0 0.0
    %473 = vmatpush1.msra.mxu0 0.0
    %474 = vmatprep.subr.mxu0 0.0
    %475 = vmatpush1.msra.mxu0 0.0
    %476 = vmatprep.subr.mxu0 0.0
    %477 = vmatpush1.msra.mxu0 0.0
    %478 = vmatprep.subr.mxu0 0.0
    %479 = vmatpush1.msra.mxu0 0.0
    %480 = vmatprep.subr.mxu0 0.0
    %481 = vmatpush1.msra.mxu0 0.0
    %482 = vmatprep.subr.mxu0 0.0
    %483 = vmatpush1.msra.mxu0 0.0
    %484 = vmatprep.subr.mxu0 0.0
    %485 = vmatpush1.msra.mxu0 0.0
    %486 = vmatprep.mubr.f32.mxu0 0.0
    %487 = vmatmul.mubr.f32.gmra.mrb[0].mxu0 %v420
    %v488 = vpop.f32.mrb[0].mxu0
    %v489 = vadd.f32 0.0, %v488
    %v490 = vpop.f32.mrb[0].mxu0
    %491 = vdwg.mxu0
    %v492 = vsel %vm166, %v413, %v157
    %v493 = vsel %vm166, %v489, %v158
    %vm494 = vcmask 130048
    %v495 = vsel %vm494, %v492, %v157
    %v496 = vsel %vm494, %v493, %v158
    %vm497 = vcmask 195584
    %498 = vst.msk [vmem:[#allocation2] sm:$0xff] %vm497, %v495
    %499 = vst.msk [vmem:[#allocation2 + $0x8] sm:$0xff] %vm497, %v496
    // Predicated region
    $region22: #{tpu_custom_call.1} parent=1 // pred_check
      _
    $region23: #{tpu_custom_call.1} parent=1 // pred_check_branch
      %501 = sbr.rel (0) target = $region25
    $region24: #{tpu_custom_call.1} parent=1 // pred_region
      %s503 = ssub.s32 256, 256
      %504 = vsyncadd [#allocation3], %s503
      %s505 = sshll.u32 [#allocation2], 4
      %s506 = int_to_ptr.vmem [resolvable:$true] %s505
      %511 = dma.vmem_to_hbm [thread:$0]  %s506, 256, %s5, [#allocation3], 128, 128, 8
    $region25: #{tpu_custom_call.1} parent=1 // pred_fallthru
      _
    // Predicated region
    $region26: #{tpu_custom_call.1} parent=1 // pred_check
      _
    $region27: #{tpu_custom_call.1} parent=1 // pred_check_branch
      %513 = sbr.rel (0) target = $region29
    $region28: #{tpu_custom_call.1} parent=1 // pred_region
      %514 = dma.done [#allocation3], 256
    $region29: #{tpu_custom_call.1} parent=1 // pred_fallthru
      _
    %515 = vsyncpa [#allocation3], 1

</llo_original>
